<compile_context>
chip_gen: v7x
topology: tpu7x:2x2x1
jax: 0.10.0
libtpu: 0.0.40
codegen_flags: <defaults>
</compile_context>

<pallas_src>
import functools
import typing as typ

import jax
import jax.numpy as jnp
from jax.experimental import pallas as pl
from jax.experimental.pallas import tpu as pltpu

_LANE = 128     # lane width: hidden/output feature dims padded to this
_SUBLANE = 8    # sublane width: batch tile / first-layer in_dim alignment


def _round_up(x: int, m: int) -> int:
    return ((x + m - 1) // m) * m


# ---------------------------------------------------------------------------
# Kernel
# ---------------------------------------------------------------------------
def _ddpg_policy_kernel(x_ref, *refs, num_hidden: int, action_bound: float):
    """refs = (w0, b0, w1, b1, ..., w_out, b_out, o_ref).

    x_ref is one (TB, state_p) batch tile (f32); weights are bf16 and biases
    f32, all VMEM-resident across the whole grid.  Matmuls run bf16 x bf16
    with f32 accumulation; bias add / ReLU / tanh stay in f32.
    """
    o_ref = refs[-1]
    p = refs[:-1]  # 2 * (num_hidden + 1) parameter refs

    h = x_ref[...]                                            # f32
    for i in range(num_hidden):
        w = p[2 * i][...]                                     # bf16 (in_p, out_p)
        b = p[2 * i + 1][...]                                 # f32  (1, out_p)
        y = jnp.dot(h.astype(jnp.bfloat16), w,
                    preferred_element_type=jnp.float32) + b
        h = jnp.maximum(y, 0.0)                               # padded lanes stay 0
    w_out = p[2 * num_hidden][...]
    b_out = p[2 * num_hidden + 1][...]
    y = jnp.dot(h.astype(jnp.bfloat16), w_out,
                preferred_element_type=jnp.float32) + b_out
    o_ref[...] = (jnp.tanh(y) * action_bound).astype(o_ref.dtype)


# ---------------------------------------------------------------------------
# Helpers
# ---------------------------------------------------------------------------
def _physical_vmem_bytes() -> int:
    try:
        return int(pltpu.get_tpu_info().vmem_capacity_bytes)
    except Exception:
        return 64 << 20   # conservative fallback (v7x per-TensorCore VMEM)


def _choose_batch_tiling(batch: int, batch_tile: int):
    """Balanced tiles, multiple of 8 rows, >=2 (even) tiles for v7x megacore."""
    n_tiles = max(1, -(-batch // batch_tile))
    if n_tiles == 1 and batch >= 2 * _SUBLANE:
        n_tiles = 2                       # give both v7x TCs work
    if n_tiles > 1 and n_tiles % 2:
        n_tiles += 1                      # even tile count balances the 2 TCs
    tb = _round_up(-(-batch // n_tiles), _SUBLANE)
    return tb, n_tiles * tb, n_tiles


# ---------------------------------------------------------------------------
# Wrapper
# ---------------------------------------------------------------------------
def ddpg_policy_forward(x: jax.Array,
                        padded_params: typ.List[typ.Tuple[jax.Array, jax.Array]],
                        action_bound: float = 1.0,
                        *,
                        action_dim: int = None,
                        batch_tile: int = 1024) -> jax.Array:
    """Run the DDPGPolicyNet forward pass in one pipelined Pallas call.

    x:             (batch, state_dim) float32 (unpadded).
    padded_params: list of (W, b); W (in_pad, out_pad) bf16, b (1, out_pad) f32,
                   produced by pad_params().
    action_dim:    true (unpadded) action dimension; defaults to the padded one.
    batch_tile:    max rows per grid step (v5e users may prefer 256-512 if the
                   bundle dump shows store-slot saturation / spills).
    """
    num_hidden = len(padded_params) - 1
    batch, state_dim = x.shape
    state_p = padded_params[0][0].shape[0]
    action_dim_p = padded_params[-1][0].shape[1]
    if action_dim is None:
        action_dim = action_dim_p

    # Feature pad only up to the sublane-aligned first-layer in_dim (usually a
    # no-op) -- never the 8x lane-inflation of padding state_dim to 128.
    if state_p != state_dim:
        x = jnp.pad(x, ((0, 0), (0, state_p - state_dim)))

    tb, batch_p, n_tiles = _choose_batch_tiling(batch, batch_tile)
    if batch_p != batch:
        x = jnp.pad(x, ((0, batch_p - batch), (0, 0)))
    grid = (n_tiles,)

    flat_params = []
    for w, b in padded_params:
        flat_params.extend([w, b])

    def _resident_spec(shape):
        # Constant block index -> parameter stays VMEM-resident across steps
        # (shape bound through the argument; no late-binding bug).
        # TODO(synk): add pipeline_mode=pl.Buffered(1) to drop the default 2x
        # input buffering if hidden dims ever grow enough to pressure v7x's
        # 64 MiB VMEM; the vmem estimate below already accounts for the 2x.
        return pl.BlockSpec(shape, lambda i: (0, 0),
                            memory_space=pltpu.MemorySpace.VMEM)

    in_specs = [pl.BlockSpec((tb, state_p), lambda i: (i, 0),
                             memory_space=pltpu.MemorySpace.VMEM)]
    in_specs += [_resident_spec(p.shape) for p in flat_params]
    out_specs = pl.BlockSpec((tb, action_dim_p), lambda i: (i, 0),
                             memory_space=pltpu.MemorySpace.VMEM)

    # --- VMEM budget (Pallas double-buffers every input by default) ---------
    param_bytes = sum(int(p.size) * p.dtype.itemsize for p in flat_params)
    widest = max([action_dim_p] + [w.shape[1] for w, _ in padded_params])
    vmem_bytes = 2 * param_bytes                          # resident params, 2x-buffered
    vmem_bytes += 2 * tb * state_p * x.dtype.itemsize     # x tile, double-buffered
    vmem_bytes += 2 * tb * action_dim_p * 4               # out tile, double-buffered
    vmem_bytes += 4 * tb * widest * 4                     # live activations / spill slack
    phys = _physical_vmem_bytes()
    cap = min(96 << 20, (phys * 3) // 4)                  # ~96 MiB v5e/v6e, ~48 MiB v7x
    vmem_limit = int(min(max(int(1.5 * vmem_bytes), 8 << 20), cap))

    # --- Cost estimate hint for XLA scheduling ------------------------------
    flops = 2 * batch_p * sum(int(w.shape[0]) * int(w.shape[1])
                              for w, _ in padded_params)
    bytes_accessed = (int(x.size) * x.dtype.itemsize + param_bytes
                      + batch_p * action_dim_p * 4)
    cost = pl.CostEstimate(flops=flops,
                           transcendentals=batch_p * action_dim_p,
                           bytes_accessed=bytes_accessed)

    kernel = functools.partial(_ddpg_policy_kernel,
                               num_hidden=num_hidden,
                               action_bound=float(action_bound))

    out = pl.pallas_call(
        kernel,
        out_shape=jax.ShapeDtypeStruct((batch_p, action_dim_p), jnp.float32),
        grid=grid,
        in_specs=in_specs,
        out_specs=out_specs,
        compiler_params=pltpu.CompilerParams(
            dimension_semantics=("parallel",),   # v7x megacore sharding
            vmem_limit_bytes=vmem_limit),
        cost_estimate=cost,
    )(x, *flat_params)

    # Drop batch padding and padded action lanes.
    return out[:batch, :action_dim]


# ---------------------------------------------------------------------------
# Parameter construction
# ---------------------------------------------------------------------------
def init_params(key: jax.Array,
                state_dim: int,
                hidden_layers_dim: typ.List[int],
                action_dim: int):
    """nn.Linear-style init (uniform +-1/sqrt(fan_in)); W stored as (in, out)."""
    dims = [state_dim] + list(hidden_layers_dim) + [action_dim]
    params = []
    for i in range(len(dims) - 1):
        in_d, out_d = dims[i], dims[i + 1]
        key, kw, kb = jax.random.split(key, 3)
        bound = 1.0 / float(in_d) ** 0.5
        w = jax.random.uniform(kw, (in_d, out_d), jnp.float32, -bound, bound)
        b = jax.random.uniform(kb, (1, out_d), jnp.float32, -bound, bound)
        params.append((w, b))
    return params


def pad_params(params, lane: int = _LANE):
    """Zero-pad feature dims and cast weights to bf16 (biases stay f32).

    First-layer in_dim is only sublane(8)-aligned (pairs with the unpadded x
    feature block); all other feature dims are lane-padded to 128 so every
    matmul tile and the output store are lane-dense.  Zero padding is exactly
    preserved through Linear+ReLU, so results are unchanged.
    """
    padded = []
    for idx, (w, b) in enumerate(params):
        in_d, out_d = w.shape
        in_p = _round_up(in_d, _SUBLANE if idx == 0 else lane)
        out_p = _round_up(out_d, lane)
        w_p = jnp.zeros((in_p, out_p), jnp.float32).at[:in_d, :out_d].set(w)
        b_p = jnp.zeros((1, out_p), jnp.float32).at[:, :out_d].set(b)
        padded.append((w_p.astype(jnp.bfloat16), b_p))
    return padded


def reference_forward(x, params, action_bound):
    """Pure-JAX f32 reference (matches the PyTorch forward)."""
    h = x
    for w, b in params[:-1]:
        h = jnp.maximum(h @ w + b, 0.0)
    w, b = params[-1]
    return jnp.tanh(h @ w + b) * action_bound


# ---------------------------------------------------------------------------
# Self-test
# ---------------------------------------------------------------------------
if __name__ == "__main__":
    # Small shapes consistent with the module: state_dim=16, hidden=[32, 32],
    # action_dim=4, batch=8, action_bound=2.0, state_feature_share=False.
    batch = 8
    state_dim = 16
    hidden_layers_dim = [32, 32]
    action_dim = 4
    action_bound = 2.0

    key = jax.random.PRNGKey(0)
    key, kx = jax.random.split(key)
    x = jax.random.normal(kx, (batch, state_dim), jnp.float32)

    params = init_params(key, state_dim, hidden_layers_dim, action_dim)
    padded = pad_params(params)

    out = ddpg_policy_forward(x, padded, action_bound, action_dim=action_dim)
    out = jax.block_until_ready(out)

    ref = reference_forward(x, params, action_bound)
    assert out.shape == (batch, action_dim), out.shape
    # bf16 weights / bf16 matmul inputs (f32 accumulation) => small numerical
    # drift vs the pure-f32 reference, so the tolerance is loosened.
    assert jnp.allclose(out, ref, atol=3e-2, rtol=3e-2), "mismatch vs reference"

    print("KERNEL_OK")
</pallas_src>

<mosaic_0001>
module attributes {stable_mosaic.version = 11 : i64} {
  func.func @_ddpg_policy_kernel(%arg0: i32, %arg1: memref<8x16xf32, #tpu.memory_space<vmem>>, %arg2: memref<16x128xbf16, #tpu.memory_space<vmem>>, %arg3: memref<1x128xf32, #tpu.memory_space<vmem>>, %arg4: memref<128x128xbf16, #tpu.memory_space<vmem>>, %arg5: memref<1x128xf32, #tpu.memory_space<vmem>>, %arg6: memref<128x128xbf16, #tpu.memory_space<vmem>>, %arg7: memref<1x128xf32, #tpu.memory_space<vmem>>, %arg8: memref<8x128xf32, #tpu.memory_space<vmem>>) attributes {dimension_semantics = [#tpu.dimension_semantics<parallel>], iteration_bounds = array<i64: 1>, scalar_prefetch = 0 : i64, scratch_operands = 0 : i64, tpu.core_type = #tpu.core_type<tc>, window_params = [{transform_indices = @transform_0, window_bounds = array<i64: 8, 16>}, {pipeline_mode = #tpu.pipeline_mode<synchronous>, transform_indices = @transform_1, window_bounds = array<i64: 16, 128>}, {pipeline_mode = #tpu.pipeline_mode<synchronous>, transform_indices = @transform_2, window_bounds = array<i64: 1, 128>}, {pipeline_mode = #tpu.pipeline_mode<synchronous>, transform_indices = @transform_3, window_bounds = array<i64: 128, 128>}, {pipeline_mode = #tpu.pipeline_mode<synchronous>, transform_indices = @transform_4, window_bounds = array<i64: 1, 128>}, {pipeline_mode = #tpu.pipeline_mode<synchronous>, transform_indices = @transform_5, window_bounds = array<i64: 128, 128>}, {pipeline_mode = #tpu.pipeline_mode<synchronous>, transform_indices = @transform_6, window_bounds = array<i64: 1, 128>}, {transform_indices = @transform_7, window_bounds = array<i64: 8, 128>}]} {
    %c0 = arith.constant 0 : index
    %c0_0 = arith.constant 0 : index
    %0 = vector.load %arg1[%c0, %c0_0] : memref<8x16xf32, #tpu.memory_space<vmem>>, vector<8x16xf32>
    %c0_1 = arith.constant 0 : index
    %c0_2 = arith.constant 0 : index
    %1 = vector.load %arg2[%c0_1, %c0_2] : memref<16x128xbf16, #tpu.memory_space<vmem>>, vector<16x128xbf16>
    %c0_3 = arith.constant 0 : index
    %c0_4 = arith.constant 0 : index
    %2 = vector.load %arg3[%c0_3, %c0_4] : memref<1x128xf32, #tpu.memory_space<vmem>>, vector<1x128xf32>
    %3 = arith.truncf %0 : vector<8x16xf32> to vector<8x16xbf16>
    %cst = arith.constant dense<0.000000e+00> : vector<8x128xf32>
    %4 = tpu.matmul %3, %1, %cst {dimension_numbers = #tpu.dot_dimension_numbers<[1], [0], [0], [1], [0, 0, 1, 1], [], []>} : vector<8x16xbf16>, vector<16x128xbf16>, vector<8x128xf32> -> vector<8x128xf32>
    %5 = vector.broadcast %2 : vector<1x128xf32> to vector<8x128xf32>
    %6 = arith.addf %4, %5 : vector<8x128xf32>
    %cst_5 = arith.constant 0.000000e+00 : f32
    %7 = vector.broadcast %cst_5 : f32 to vector<8x128xf32>
    %8 = arith.maximumf %6, %7 : vector<8x128xf32>
    %c0_6 = arith.constant 0 : index
    %c0_7 = arith.constant 0 : index
    %9 = vector.load %arg4[%c0_6, %c0_7] : memref<128x128xbf16, #tpu.memory_space<vmem>>, vector<128x128xbf16>
    %c0_8 = arith.constant 0 : index
    %c0_9 = arith.constant 0 : index
    %10 = vector.load %arg5[%c0_8, %c0_9] : memref<1x128xf32, #tpu.memory_space<vmem>>, vector<1x128xf32>
    %11 = arith.truncf %8 : vector<8x128xf32> to vector<8x128xbf16>
    %cst_10 = arith.constant dense<0.000000e+00> : vector<8x128xf32>
    %12 = tpu.matmul %11, %9, %cst_10 {dimension_numbers = #tpu.dot_dimension_numbers<[1], [0], [0], [1], [0, 0, 1, 1], [], []>} : vector<8x128xbf16>, vector<128x128xbf16>, vector<8x128xf32> -> vector<8x128xf32>
    %13 = vector.broadcast %10 : vector<1x128xf32> to vector<8x128xf32>
    %14 = arith.addf %12, %13 : vector<8x128xf32>
    %cst_11 = arith.constant 0.000000e+00 : f32
    %15 = vector.broadcast %cst_11 : f32 to vector<8x128xf32>
    %16 = arith.maximumf %14, %15 : vector<8x128xf32>
    %c0_12 = arith.constant 0 : index
    %c0_13 = arith.constant 0 : index
    %17 = vector.load %arg6[%c0_12, %c0_13] : memref<128x128xbf16, #tpu.memory_space<vmem>>, vector<128x128xbf16>
    %c0_14 = arith.constant 0 : index
    %c0_15 = arith.constant 0 : index
    %18 = vector.load %arg7[%c0_14, %c0_15] : memref<1x128xf32, #tpu.memory_space<vmem>>, vector<1x128xf32>
    %19 = arith.truncf %16 : vector<8x128xf32> to vector<8x128xbf16>
    %cst_16 = arith.constant dense<0.000000e+00> : vector<8x128xf32>
    %20 = tpu.matmul %19, %17, %cst_16 {dimension_numbers = #tpu.dot_dimension_numbers<[1], [0], [0], [1], [0, 0, 1, 1], [], []>} : vector<8x128xbf16>, vector<128x128xbf16>, vector<8x128xf32> -> vector<8x128xf32>
    %21 = vector.broadcast %18 : vector<1x128xf32> to vector<8x128xf32>
    %22 = arith.addf %20, %21 : vector<8x128xf32>
    %23 = math.tanh %22 : vector<8x128xf32>
    %cst_17 = arith.constant 2.000000e+00 : f32
    %24 = vector.broadcast %cst_17 : f32 to vector<8x128xf32>
    %25 = arith.mulf %23, %24 : vector<8x128xf32>
    %c0_18 = arith.constant 0 : index
    %c0_19 = arith.constant 0 : index
    %26 = vector.load %arg8[%c0_18, %c0_19] : memref<8x128xf32, #tpu.memory_space<vmem>>, vector<8x128xf32>
    tpu.vector_store %arg8[%c0_18, %c0_19], %25 {strides = array<i32>} : memref<8x128xf32, #tpu.memory_space<vmem>>, vector<8x128xf32>,
    return
  }
  func.func @transform_0(%arg0: i32) -> (i32, i32) {
    %c0_i32 = arith.constant 0 : i32
    %c0_i32_0 = arith.constant 0 : i32
    return %arg0, %c0_i32 : i32, i32
  }
  func.func @transform_1(%arg0: i32) -> (i32, i32) {
    %c0_i32 = arith.constant 0 : i32
    %c0_i32_0 = arith.constant 0 : i32
    %c0_i32_1 = arith.constant 0 : i32
    return %c0_i32, %c0_i32_0 : i32, i32
  }
  func.func @transform_2(%arg0: i32) -> (i32, i32) {
    %c0_i32 = arith.constant 0 : i32
    %c0_i32_0 = arith.constant 0 : i32
    %c0_i32_1 = arith.constant 0 : i32
    return %c0_i32, %c0_i32_0 : i32, i32
  }
  func.func @transform_3(%arg0: i32) -> (i32, i32) {
    %c0_i32 = arith.constant 0 : i32
    %c0_i32_0 = arith.constant 0 : i32
    %c0_i32_1 = arith.constant 0 : i32
    return %c0_i32, %c0_i32_0 : i32, i32
  }
  func.func @transform_4(%arg0: i32) -> (i32, i32) {
    %c0_i32 = arith.constant 0 : i32
    %c0_i32_0 = arith.constant 0 : i32
    %c0_i32_1 = arith.constant 0 : i32
    return %c0_i32, %c0_i32_0 : i32, i32
  }
  func.func @transform_5(%arg0: i32) -> (i32, i32) {
    %c0_i32 = arith.constant 0 : i32
    %c0_i32_0 = arith.constant 0 : i32
    %c0_i32_1 = arith.constant 0 : i32
    return %c0_i32, %c0_i32_0 : i32, i32
  }
  func.func @transform_6(%arg0: i32) -> (i32, i32) {
    %c0_i32 = arith.constant 0 : i32
    %c0_i32_0 = arith.constant 0 : i32
    %c0_i32_1 = arith.constant 0 : i32
    return %c0_i32, %c0_i32_0 : i32, i32
  }
  func.func @transform_7(%arg0: i32) -> (i32, i32) {
    %c0_i32 = arith.constant 0 : i32
    %c0_i32_0 = arith.constant 0 : i32
    return %arg0, %c0_i32 : i32, i32
  }
}

</mosaic_0001>

<llo_original>
// kernel: tpu_custom_call.1
$region0: #{tpu_custom_call.1}
  #allocation0 [shape = 'u32[]', space=smem, size = 0x4, offset = 0x4, fixed_abs, tag = 'smem constant byte address 0x4 - core index']
  #allocation1 [shape = 'u32[144,128]{1,0:T(1,128)}', space=vmem, size = 0x12000, scoped, tag = 'internal scratch']
  %s0 = inlined_call_operand.hbm [shape: f32[8,16], index: 0, kind: input, shape index: {}]
  %s1 = inlined_call_operand.hbm [shape: bf16[16,128], index: 1, kind: input, shape index: {}]
  %s2 = inlined_call_operand.vmem [shape: f32[1,128], index: 2, kind: input, shape index: {}]
  %s3 = inlined_call_operand.hbm [shape: bf16[128,128], index: 3, kind: input, shape index: {}]
  %s4 = inlined_call_operand.vmem [shape: f32[1,128], index: 4, kind: input, shape index: {}]
  %s5 = inlined_call_operand.hbm [shape: bf16[128,128], index: 5, kind: input, shape index: {}]
  %s6 = inlined_call_operand.vmem [shape: f32[1,128], index: 6, kind: input, shape index: {}]
  %s7 = inlined_call_operand.hbm [shape: f32[8,128], index: 7, kind: output, shape index: {}]
  %s8 = sld [smem:[#allocation0]]
  $region54: #{tpu_custom_call.1} parent=0
    _
  %s10 = ssub.s32 1, %s8
  %s11 = scalar_select 0, %s10, %s8
  $region1: #{tpu_custom_call.1} parent=0
    #allocation2 [shape = 'u8[4096]{0}', space=vmem, size = 0x1000, scoped, tag = 'input window, operand 0, single buffered']
    #allocation3 [shape = 's32[1]{0}', space=sflag, size = 0x4, scoped, tag = 'scoped memory for tpu_custom_call.1']
    #allocation4 [shape = 's32[1]{0}', space=sflag, size = 0x4, scoped, tag = 'scoped memory for tpu_custom_call.1']
    #allocation5 [shape = 'u8[4096]{0}', space=vmem, size = 0x1000, scoped, tag = 'input window, operand 1, single buffered']
    #allocation6 [shape = 's32[1]{0}', space=sflag, size = 0x4, scoped, tag = 'scoped memory for tpu_custom_call.1']
    #allocation7 [shape = 'u8[32768]{0}', space=vmem, size = 0x8000, scoped, tag = 'input window, operand 3, single buffered']
    #allocation8 [shape = 'u8[32768]{0}', space=vmem, size = 0x8000, scoped, tag = 'input window, operand 5, single buffered']
    #allocation9 [shape = 's32[1]{0}', space=sflag, size = 0x4, scoped, tag = 'scoped memory for tpu_custom_call.1']
    #allocation10 [shape = 'u8[4096]{0}', space=vmem, size = 0x1000, scoped, tag = 'output window, operand 0, single buffered']
    %12 = vsyncpa [#allocation3], 0
    %13 = vsyncpa [#allocation6], 0
    %14 = vsyncpa [#allocation9], 0
    %15 = vsyncpa [#allocation4], 0
    // Predicated region
    $region2: #{tpu_custom_call.1} parent=1 // pred_check
      _
    $region3: #{tpu_custom_call.1} parent=1 // pred_check_branch
      %17 = sbr.rel (0) target = $region5
    $region4: #{tpu_custom_call.1} parent=1 // pred_region
      %s19 = ssub.s32 128, 128
      %20 = vsyncadd [#allocation3], %s19
      %s22 = sshll.u32 [#allocation2], 4
      %s23 = int_to_ptr.vmem [resolvable:$true] %s22
      %25 = dma.hbm_to_vmem [thread:$0]  %s0, 128, %s23, [#allocation3]
    $region5: #{tpu_custom_call.1} parent=1 // pred_fallthru
      _
    // Predicated region
    $region6: #{tpu_custom_call.1} parent=1 // pred_check
      _
    $region7: #{tpu_custom_call.1} parent=1 // pred_check_branch
      %27 = sbr.rel (0) target = $region9
    $region8: #{tpu_custom_call.1} parent=1 // pred_region
      %s29 = ssub.s32 128, 128
      %30 = vsyncadd [#allocation6], %s29
      %s31 = sshll.u32 [#allocation5], 4
      %s32 = int_to_ptr.vmem [resolvable:$true] %s31
      %37 = dma.hbm_to_vmem [thread:$0]  %s1, 128, %s32, [#allocation6], 64, 64, 4
    $region9: #{tpu_custom_call.1} parent=1 // pred_fallthru
      _
    // Predicated region
    $region10: #{tpu_custom_call.1} parent=1 // pred_check
      _
    $region11: #{tpu_custom_call.1} parent=1 // pred_check_branch
      %39 = sbr.rel (0) target = $region13
    $region12: #{tpu_custom_call.1} parent=1 // pred_region
      _
    $region13: #{tpu_custom_call.1} parent=1 // pred_fallthru
      _
    // Predicated region
    $region14: #{tpu_custom_call.1} parent=1 // pred_check
      _
    $region15: #{tpu_custom_call.1} parent=1 // pred_check_branch
      %41 = sbr.rel (0) target = $region17
    $region16: #{tpu_custom_call.1} parent=1 // pred_region
      %s43 = ssub.s32 1024, 1024
      %44 = vsyncadd [#allocation6], %s43
      %s45 = sshll.u32 [#allocation7], 4
      %s46 = int_to_ptr.vmem [resolvable:$true] %s45
      %51 = dma.hbm_to_vmem [thread:$0]  %s3, 1024, %s46, [#allocation6], 64, 64, 4
    $region17: #{tpu_custom_call.1} parent=1 // pred_fallthru
      _
    // Predicated region
    $region18: #{tpu_custom_call.1} parent=1 // pred_check
      _
    $region19: #{tpu_custom_call.1} parent=1 // pred_check_branch
      %53 = sbr.rel (0) target = $region21
    $region20: #{tpu_custom_call.1} parent=1 // pred_region
      _
    $region21: #{tpu_custom_call.1} parent=1 // pred_fallthru
      _
    // Predicated region
    $region22: #{tpu_custom_call.1} parent=1 // pred_check
      _
    $region23: #{tpu_custom_call.1} parent=1 // pred_check_branch
      %55 = sbr.rel (0) target = $region25
    $region24: #{tpu_custom_call.1} parent=1 // pred_region
      %s57 = ssub.s32 1024, 1024
      %58 = vsyncadd [#allocation9], %s57
      %s59 = sshll.u32 [#allocation8], 4
      %s60 = int_to_ptr.vmem [resolvable:$true] %s59
      %65 = dma.hbm_to_vmem [thread:$0]  %s5, 1024, %s60, [#allocation9], 64, 64, 4
    $region25: #{tpu_custom_call.1} parent=1 // pred_fallthru
      _
    // Predicated region
    $region26: #{tpu_custom_call.1} parent=1 // pred_check
      _
    $region27: #{tpu_custom_call.1} parent=1 // pred_check_branch
      %67 = sbr.rel (0) target = $region29
    $region28: #{tpu_custom_call.1} parent=1 // pred_region
      _
    $region29: #{tpu_custom_call.1} parent=1 // pred_fallthru
      _
    // Predicated region
    $region30: #{tpu_custom_call.1} parent=1 // pred_check
      _
    $region31: #{tpu_custom_call.1} parent=1 // pred_check_branch
      %69 = sbr.rel (0) target = $region33
    $region32: #{tpu_custom_call.1} parent=1 // pred_region
      %70 = dma.done [#allocation3], 128
    $region33: #{tpu_custom_call.1} parent=1 // pred_fallthru
      _
    // Predicated region
    $region34: #{tpu_custom_call.1} parent=1 // pred_check
      _
    $region35: #{tpu_custom_call.1} parent=1 // pred_check_branch
      %72 = sbr.rel (0) target = $region37
    $region36: #{tpu_custom_call.1} parent=1 // pred_region
      %73 = dma.done [#allocation6], 128
    $region37: #{tpu_custom_call.1} parent=1 // pred_fallthru
      _
    // Predicated region
    $region38: #{tpu_custom_call.1} parent=1 // pred_check
      _
    $region39: #{tpu_custom_call.1} parent=1 // pred_check_branch
      %75 = sbr.rel (0) target = $region41
    $region40: #{tpu_custom_call.1} parent=1 // pred_region
      %76 = dma.done [#allocation6], 1024
    $region41: #{tpu_custom_call.1} parent=1 // pred_fallthru
      _
    // Predicated region
    $region42: #{tpu_custom_call.1} parent=1 // pred_check
      _
    $region43: #{tpu_custom_call.1} parent=1 // pred_check_branch
      %78 = sbr.rel (0) target = $region45
    $region44: #{tpu_custom_call.1} parent=1 // pred_region
      %79 = dma.done [#allocation9], 1024
    $region45: #{tpu_custom_call.1} parent=1 // pred_fallthru
      _
    %v81 = vld [vmem:[#allocation2] sm:$0xff]
    %v82 = vld [vmem:[#allocation5] sm:$0xf]
    %v83 = vld [vmem:[#allocation5 + $0x4] sm:$0xf]
    %v84 = vld [vmem:[%s2] sm:$0x1]
    %v85 = vpack.c.bf16 %v81, %v81
    %v87 = vlaneseq
    %v88 = vshrl.u32 %v87, 7
    %v89 = vsub.s32 0, %v88
    %v90 = vrot.slane %v84, %v89
    %v94 = vunpack.c.l.b16 %v82
    %v95 = vunpack.c.l.b16 %v83
    %v96 = vpack.c.b16 %v95, %v94
    %vm98 = vcmask 130048
    %v100 = vsel %vm98, %v85, 0
    %102 = vmatprep.subr.bf16.mxu0 0
    %103 = vmatpush1.bf16.msra.mxu0 %v96
    %104 = vmatprep.subr.bf16.mxu0 0
    %105 = vmatpush1.bf16.msra.mxu0 0
    %106 = vmatprep.subr.bf16.mxu0 0
    %107 = vmatpush1.bf16.msra.mxu0 0
    %108 = vmatprep.subr.bf16.mxu0 0
    %109 = vmatpush1.bf16.msra.mxu0 0
    %110 = vmatprep.subr.bf16.mxu0 0
    %111 = vmatpush1.bf16.msra.mxu0 0
    %112 = vmatprep.subr.bf16.mxu0 0
    %113 = vmatpush1.bf16.msra.mxu0 0
    %114 = vmatprep.subr.bf16.mxu0 0
    %115 = vmatpush1.bf16.msra.mxu0 0
    %116 = vmatprep.subr.bf16.mxu0 0
    %117 = vmatpush1.bf16.msra.mxu0 0
    %118 = vmatprep.subr.bf16.mxu0 0
    %119 = vmatpush1.bf16.msra.mxu0 0
    %120 = vmatprep.subr.bf16.mxu0 0
    %121 = vmatpush1.bf16.msra.mxu0 0
    %122 = vmatprep.subr.bf16.mxu0 0
    %123 = vmatpush1.bf16.msra.mxu0 0
    %124 = vmatprep.subr.bf16.mxu0 0
    %125 = vmatpush1.bf16.msra.mxu0 0
    %126 = vmatprep.subr.bf16.mxu0 0
    %127 = vmatpush1.bf16.msra.mxu0 0
    %128 = vmatprep.subr.bf16.mxu0 0
    %129 = vmatpush1.bf16.msra.mxu0 0
    %130 = vmatprep.subr.bf16.mxu0 0
    %131 = vmatpush1.bf16.msra.mxu0 0
    %132 = vmatprep.subr.bf16.mxu0 0
    %133 = vmatpush1.bf16.msra.mxu0 0
    %134 = vmatprep.mubr.bf16.mxu0 0
    %135 = vmatmul.mubr.bf16.gmra.mrb[0].mxu0 %v100
    %v136 = vpop.f32.mrb[0].mxu0
    %v137 = vadd.f32 %v90, %v136
    %v138 = vpop.f32.mrb[0].mxu0
    %v139 = vpop.f32.mrb[0].mxu0
    %v140 = vpop.f32.mrb[0].mxu0
    %141 = vdwg.mxu0
    %v142 = vmax.f32 %v137, 0.0
    %v143 = vld [vmem:[#allocation7] sm:$0xf]
    %v144 = vld [vmem:[#allocation7 + $0x4] sm:$0xf]
    %v145 = vld [vmem:[#allocation7 + $0x8] sm:$0xf]
    %v146 = vld [vmem:[#allocation7 + $0xc] sm:$0xf]
    %v147 = vld [vmem:[#allocation7 + $0x10] sm:$0xf]
    %v148 = vld [vmem:[#allocation7 + $0x14] sm:$0xf]
    %v149 = vld [vmem:[#allocation7 + $0x18] sm:$0xf]
    %v150 = vld [vmem:[#allocation7 + $0x1c] sm:$0xf]
    %v151 = vld [vmem:[#allocation7 + $0x20] sm:$0xf]
    %v152 = vld [vmem:[#allocation7 + $0x24] sm:$0xf]
    %v153 = vld [vmem:[#allocation7 + $0x28] sm:$0xf]
    %v154 = vld [vmem:[#allocation7 + $0x2c] sm:$0xf]
    %v155 = vld [vmem:[#allocation7 + $0x30] sm:$0xf]
    %v156 = vld [vmem:[#allocation7 + $0x34] sm:$0xf]
    %v157 = vld [vmem:[#allocation7 + $0x38] sm:$0xf]
    %v158 = vld [vmem:[#allocation7 + $0x3c] sm:$0xf]
    %v159 = vld [vmem:[%s4] sm:$0x1]
    %v160 = vpack.c.bf16 %v142, %v142
    %v162 = vlaneseq
    %v163 = vshrl.u32 %v162, 7
    %v164 = vsub.s32 0, %v163
    %v165 = vrot.slane %v159, %v164
    %v183 = vunpack.c.l.b16 %v143
    %v184 = vunpack.c.l.b16 %v144
    %v185 = vunpack.c.l.b16 %v145
    %v186 = vunpack.c.l.b16 %v146
    %v187 = vunpack.c.l.b16 %v147
    %v188 = vunpack.c.l.b16 %v148
    %v189 = vunpack.c.l.b16 %v149
    %v190 = vunpack.c.l.b16 %v150
    %v191 = vunpack.c.l.b16 %v151
    %v192 = vunpack.c.l.b16 %v152
    %v193 = vunpack.c.l.b16 %v153
    %v194 = vunpack.c.l.b16 %v154
    %v195 = vunpack.c.l.b16 %v155
    %v196 = vunpack.c.l.b16 %v156
    %v197 = vunpack.c.l.b16 %v157
    %v198 = vunpack.c.l.b16 %v158
    %v199 = vpack.c.b16 %v184, %v183
    %v200 = vpack.c.b16 %v186, %v185
    %v201 = vpack.c.b16 %v188, %v187
    %v202 = vpack.c.b16 %v190, %v189
    %v203 = vpack.c.b16 %v192, %v191
    %v204 = vpack.c.b16 %v194, %v193
    %v205 = vpack.c.b16 %v196, %v195
    %v206 = vpack.c.b16 %v198, %v197
    %215 = vmatprep.subr.bf16.mxu0 0
    %216 = vmatpush1.bf16.msra.mxu0 %v199
    %217 = vmatprep.subr.bf16.mxu0 0
    %218 = vmatpush1.bf16.msra.mxu0 %v200
    %219 = vmatprep.subr.bf16.mxu0 0
    %220 = vmatpush1.bf16.msra.mxu0 %v201
    %221 = vmatprep.subr.bf16.mxu0 0
    %222 = vmatpush1.bf16.msra.mxu0 %v202
    %223 = vmatprep.subr.bf16.mxu0 0
    %224 = vmatpush1.bf16.msra.mxu0 %v203
    %225 = vmatprep.subr.bf16.mxu0 0
    %226 = vmatpush1.bf16.msra.mxu0 %v204
    %227 = vmatprep.subr.bf16.mxu0 0
    %228 = vmatpush1.bf16.msra.mxu0 %v205
    %229 = vmatprep.subr.bf16.mxu0 0
    %230 = vmatpush1.bf16.msra.mxu0 %v206
    %231 = vmatprep.subr.bf16.mxu0 0
    %232 = vmatpush1.bf16.msra.mxu0 0
    %233 = vmatprep.subr.bf16.mxu0 0
    %234 = vmatpush1.bf16.msra.mxu0 0
    %235 = vmatprep.subr.bf16.mxu0 0
    %236 = vmatpush1.bf16.msra.mxu0 0
    %237 = vmatprep.subr.bf16.mxu0 0
    %238 = vmatpush1.bf16.msra.mxu0 0
    %239 = vmatprep.subr.bf16.mxu0 0
    %240 = vmatpush1.bf16.msra.mxu0 0
    %241 = vmatprep.subr.bf16.mxu0 0
    %242 = vmatpush1.bf16.msra.mxu0 0
    %243 = vmatprep.subr.bf16.mxu0 0
    %244 = vmatpush1.bf16.msra.mxu0 0
    %245 = vmatprep.subr.bf16.mxu0 0
    %246 = vmatpush1.bf16.msra.mxu0 0
    %247 = vmatprep.mubr.bf16.mxu0 0
    %248 = vmatmul.mubr.bf16.gmra.mrb[0].mxu0 %v160
    %v249 = vpop.f32.mrb[0].mxu0
    %v250 = vadd.f32 %v165, %v249
    %v251 = vpop.f32.mrb[0].mxu0
    %v252 = vpop.f32.mrb[0].mxu0
    %v253 = vpop.f32.mrb[0].mxu0
    %254 = vdwg.mxu0
    %v255 = vmax.f32 %v250, 0.0
    %v256 = vld [vmem:[#allocation8] sm:$0xf]
    %v257 = vld [vmem:[#allocation8 + $0x4] sm:$0xf]
    %v258 = vld [vmem:[#allocation8 + $0x8] sm:$0xf]
    %v259 = vld [vmem:[#allocation8 + $0xc] sm:$0xf]
    %v260 = vld [vmem:[#allocation8 + $0x10] sm:$0xf]
    %v261 = vld [vmem:[#allocation8 + $0x14] sm:$0xf]
    %v262 = vld [vmem:[#allocation8 + $0x18] sm:$0xf]
    %v263 = vld [vmem:[#allocation8 + $0x1c] sm:$0xf]
    %v264 = vld [vmem:[#allocation8 + $0x20] sm:$0xf]
    %v265 = vld [vmem:[#allocation8 + $0x24] sm:$0xf]
    %v266 = vld [vmem:[#allocation8 + $0x28] sm:$0xf]
    %v267 = vld [vmem:[#allocation8 + $0x2c] sm:$0xf]
    %v268 = vld [vmem:[#allocation8 + $0x30] sm:$0xf]
    %v269 = vld [vmem:[#allocation8 + $0x34] sm:$0xf]
    %v270 = vld [vmem:[#allocation8 + $0x38] sm:$0xf]
    %v271 = vld [vmem:[#allocation8 + $0x3c] sm:$0xf]
    %v272 = vld [vmem:[%s6] sm:$0x1]
    %v273 = vpack.c.bf16 %v255, %v255
    %v275 = vlaneseq
    %v276 = vshrl.u32 %v275, 7
    %v277 = vsub.s32 0, %v276
    %v278 = vrot.slane %v272, %v277
    %v296 = vunpack.c.l.b16 %v256
    %v297 = vunpack.c.l.b16 %v257
    %v298 = vunpack.c.l.b16 %v258
    %v299 = vunpack.c.l.b16 %v259
    %v300 = vunpack.c.l.b16 %v260
    %v301 = vunpack.c.l.b16 %v261
    %v302 = vunpack.c.l.b16 %v262
    %v303 = vunpack.c.l.b16 %v263
    %v304 = vunpack.c.l.b16 %v264
    %v305 = vunpack.c.l.b16 %v265
    %v306 = vunpack.c.l.b16 %v266
    %v307 = vunpack.c.l.b16 %v267
    %v308 = vunpack.c.l.b16 %v268
    %v309 = vunpack.c.l.b16 %v269
    %v310 = vunpack.c.l.b16 %v270
    %v311 = vunpack.c.l.b16 %v271
    %v312 = vpack.c.b16 %v297, %v296
    %v313 = vpack.c.b16 %v299, %v298
    %v314 = vpack.c.b16 %v301, %v300
    %v315 = vpack.c.b16 %v303, %v302
    %v316 = vpack.c.b16 %v305, %v304
    %v317 = vpack.c.b16 %v307, %v306
    %v318 = vpack.c.b16 %v309, %v308
    %v319 = vpack.c.b16 %v311, %v310
    %328 = vmatprep.subr.bf16.mxu0 0
    %329 = vmatpush1.bf16.msra.mxu0 %v312
    %330 = vmatprep.subr.bf16.mxu0 0
    %331 = vmatpush1.bf16.msra.mxu0 %v313
    %332 = vmatprep.subr.bf16.mxu0 0
    %333 = vmatpush1.bf16.msra.mxu0 %v314
    %334 = vmatprep.subr.bf16.mxu0 0
    %335 = vmatpush1.bf16.msra.mxu0 %v315
    %336 = vmatprep.subr.bf16.mxu0 0
    %337 = vmatpush1.bf16.msra.mxu0 %v316
    %338 = vmatprep.subr.bf16.mxu0 0
    %339 = vmatpush1.bf16.msra.mxu0 %v317
    %340 = vmatprep.subr.bf16.mxu0 0
    %341 = vmatpush1.bf16.msra.mxu0 %v318
    %342 = vmatprep.subr.bf16.mxu0 0
    %343 = vmatpush1.bf16.msra.mxu0 %v319
    %344 = vmatprep.subr.bf16.mxu0 0
    %345 = vmatpush1.bf16.msra.mxu0 0
    %346 = vmatprep.subr.bf16.mxu0 0
    %347 = vmatpush1.bf16.msra.mxu0 0
    %348 = vmatprep.subr.bf16.mxu0 0
    %349 = vmatpush1.bf16.msra.mxu0 0
    %350 = vmatprep.subr.bf16.mxu0 0
    %351 = vmatpush1.bf16.msra.mxu0 0
    %352 = vmatprep.subr.bf16.mxu0 0
    %353 = vmatpush1.bf16.msra.mxu0 0
    %354 = vmatprep.subr.bf16.mxu0 0
    %355 = vmatpush1.bf16.msra.mxu0 0
    %356 = vmatprep.subr.bf16.mxu0 0
    %357 = vmatpush1.bf16.msra.mxu0 0
    %358 = vmatprep.subr.bf16.mxu0 0
    %359 = vmatpush1.bf16.msra.mxu0 0
    %360 = vmatprep.mubr.bf16.mxu0 0
    %361 = vmatmul.mubr.bf16.gmra.mrb[0].mxu0 %v273
    %v362 = vpop.f32.mrb[0].mxu0
    %v363 = vadd.f32 %v278, %v362
    %v364 = vpop.f32.mrb[0].mxu0
    %v365 = vpop.f32.mrb[0].mxu0
    %v366 = vpop.f32.mrb[0].mxu0
    %367 = vdwg.mxu0
    %v368 = vtanh.pop %v363
    %v369 = vmul.f32 %v368, 2.0
    %370 = vst [vmem:[#allocation10] sm:$0xff] %v369
    // Predicated region
    $region46: #{tpu_custom_call.1} parent=1 // pred_check
      _
    $region47: #{tpu_custom_call.1} parent=1 // pred_check_branch
      %372 = sbr.rel (0) target = $region49
    $region48: #{tpu_custom_call.1} parent=1 // pred_region
      %s374 = ssub.s32 128, 128
      %375 = vsyncadd [#allocation4], %s374
      %s377 = sshll.u32 [#allocation10], 4
      %s378 = int_to_ptr.vmem [resolvable:$true] %s377
      %380 = dma.vmem_to_hbm [thread:$0]  %s378, 128, %s7, [#allocation4]
    $region49: #{tpu_custom_call.1} parent=1 // pred_fallthru
      _
    // Predicated region
    $region50: #{tpu_custom_call.1} parent=1 // pred_check
      _
    $region51: #{tpu_custom_call.1} parent=1 // pred_check_branch
      %382 = sbr.rel (0) target = $region53
    $region52: #{tpu_custom_call.1} parent=1 // pred_region
      %383 = dma.done [#allocation4], 128
    $region53: #{tpu_custom_call.1} parent=1 // pred_fallthru
      _
    %384 = vsyncpa [#allocation3], 1
    %385 = vsyncpa [#allocation6], 1
    %386 = vsyncpa [#allocation9], 1
    %387 = vsyncpa [#allocation4], 1

</llo_original>
